<compile_context>
chip_gen: v5e
topology: v5e:2x2
jax: 0.10.0
libtpu: 0.0.40
codegen_flags: <defaults>
</compile_context>

<pallas_src>
import jax
import jax.numpy as jnp
from jax import lax
from jax.experimental import pallas as pl
from jax.experimental.pallas import tpu as pltpu


def _make_resblock_kernel(H, W, C, P):
    HW = H * W

    def shifted_taps(img, ch, wmask_ref):
        """img: (ch, HW) in row-major (h*W + w) order.

        Returns the im2col matrix (9*ch, HW): row block t = dy*3+dx holds the
        zero-padded 3x3 tap (dy, dx) for all ch channels.
        """
        taps = []
        for dy in range(3):
            for dx in range(3):
                s = (dy - 1) * W + (dx - 1)   # flat-index shift of this tap
                if s > 0:
                    t = jnp.concatenate(
                        [img[:, s:], jnp.zeros((ch, s), jnp.float32)], axis=1)
                elif s < 0:
                    t = jnp.concatenate(
                        [jnp.zeros((ch, -s), jnp.float32), img[:, :HW + s]],
                        axis=1)
                else:
                    t = img
                # Kill columns where the horizontal tap falls outside [0, W)
                # (those lanes currently hold a neighbouring row's value).
                if dx != 1:
                    t = t * wmask_ref[dx:dx + 1, :]
                taps.append(t)
        return jnp.concatenate(taps, axis=0)            # (9*ch, HW)

    def kernel(x_ref, w1_ref, b1_ref, w2_ref, b2_ref, wmask_ref, o_ref):
        x = x_ref[0].astype(jnp.float32)                # (C, HW)

        # ---- conv1 (3x3, pad=1) + bias + ReLU: one MXU matmul ----
        p1 = shifted_taps(x, C, wmask_ref)              # (9C, HW)
        h1 = jnp.dot(w1_ref[...], p1,
                     preferred_element_type=jnp.float32)  # (P, HW)
        h1 = jnp.maximum(h1 + b1_ref[...], 0.0)

        # ---- conv2 (3x3, pad=1) + bias: one MXU matmul ----
        p2 = shifted_taps(h1, P, wmask_ref)             # (9P, HW)
        out = jnp.dot(w2_ref[...], p2,
                      preferred_element_type=jnp.float32)  # (P, HW)
        out = out + b2_ref[...]

        # ---- residual add + final ReLU; lane-dense (P, HW) store ----
        o_ref[0] = jnp.maximum(out + x, 0.0).astype(o_ref.dtype)

    return kernel


def resblock_pallas(x_nchw, w1_oihw, b1, w2_oihw, b2):
    """ResBlock forward (stride=1, no downsample/batch_norm/attention, relu).

    x_nchw : (N, C, H, W) float32
    w1_oihw: (P, C, 3, 3), b1: (P,)
    w2_oihw: (P, P, 3, 3), b2: (P,)
    returns (N, P, H, W)
    """
    N, C, H, W = x_nchw.shape
    P = w1_oihw.shape[0]
    assert C == P, "residual add requires inplanes == planes (no downsample)"
    HW = H * W

    # Free metadata reshape: NCHW -> (N, C, H*W) (row-major, no data movement).
    x2d = x_nchw.reshape(N, C, HW)

    # OIHW -> (O, 9*I) with tap order t = (dy*3 + dx)*I + i, matching im2col.
    w1r = jnp.transpose(w1_oihw, (0, 2, 3, 1)).reshape(P, 9 * C)
    w2r = jnp.transpose(w2_oihw, (0, 2, 3, 1)).reshape(P, 9 * P)
    b1c = b1.reshape(P, 1).astype(jnp.float32)
    b2c = b2.reshape(P, 1).astype(jnp.float32)

    # Per-dx column-validity masks for the zero-padded 3x3 window in flattened
    # (h*W + w) space: valid iff 0 <= w + dx - 1 < W.  Tiny (3, HW) constant.
    wpos = jnp.arange(HW, dtype=jnp.int32) % W
    wmask = jnp.stack(
        [((wpos + dx - 1 >= 0) & (wpos + dx - 1 < W)).astype(jnp.float32)
         for dx in range(3)], axis=0)                   # (3, HW)

    kernel = _make_resblock_kernel(H, W, C, P)

    out2d = pl.pallas_call(
        kernel,
        out_shape=jax.ShapeDtypeStruct((N, P, HW), x_nchw.dtype),
        grid_spec=pltpu.PrefetchScalarGridSpec(
            num_scalar_prefetch=0,
            grid=(N,),
            in_specs=[
                pl.BlockSpec((1, C, HW), lambda n: (n, 0, 0)),
                pl.BlockSpec((P, 9 * C), lambda n: (0, 0)),
                pl.BlockSpec((P, 1), lambda n: (0, 0)),
                pl.BlockSpec((P, 9 * P), lambda n: (0, 0)),
                pl.BlockSpec((P, 1), lambda n: (0, 0)),
                pl.BlockSpec((3, HW), lambda n: (0, 0)),
            ],
            out_specs=pl.BlockSpec((1, P, HW), lambda n: (n, 0, 0)),
        ),
        compiler_params=pltpu.CompilerParams(
            dimension_semantics=("parallel",)),
    )(x2d, w1r, b1c, w2r, b2c, wmask)

    # Free metadata reshape back to NCHW (lane-dense store already done).
    return out2d.reshape(N, P, H, W)


def resblock_reference(x, w1, b1, w2, b2):
    """Pure-JAX reference (NCHW / OIHW, like PyTorch)."""
    dn = ("NCHW", "OIHW", "NCHW")
    out = lax.conv_general_dilated(x, w1, (1, 1), ((1, 1), (1, 1)),
                                   dimension_numbers=dn)
    out = jnp.maximum(out + b1[None, :, None, None], 0.0)
    out = lax.conv_general_dilated(out, w2, (1, 1), ((1, 1), (1, 1)),
                                   dimension_numbers=dn)
    out = out + b2[None, :, None, None]
    return jnp.maximum(out + x, 0.0)


if __name__ == "__main__":
    # Small shapes: batch=2, inplanes=planes=4, spatial=16x16
    N, C, H, W = 2, 4, 16, 16
    P = 4

    key = jax.random.PRNGKey(0)
    kx, kw1, kb1, kw2, kb2 = jax.random.split(key, 5)

    x = jax.random.normal(kx, (N, C, H, W), dtype=jnp.float32)

    # Deterministic Conv2d-style init (uniform in +-1/sqrt(fan_in))
    bound1 = 1.0 / (C * 3 * 3) ** 0.5
    w1 = jax.random.uniform(kw1, (P, C, 3, 3), jnp.float32, -bound1, bound1)
    b1 = jax.random.uniform(kb1, (P,), jnp.float32, -bound1, bound1)
    bound2 = 1.0 / (P * 3 * 3) ** 0.5
    w2 = jax.random.uniform(kw2, (P, P, 3, 3), jnp.float32, -bound2, bound2)
    b2 = jax.random.uniform(kb2, (P,), jnp.float32, -bound2, bound2)

    out = resblock_pallas(x, w1, b1, w2, b2)
    out = jax.block_until_ready(out)

    ref = resblock_reference(x, w1, b1, w2, b2)
    assert out.shape == (N, P, H, W)
    assert jnp.max(jnp.abs(out - ref)) < 1e-4, "mismatch vs reference"

    print("KERNEL_OK")
</pallas_src>

<mosaic_0001>
module attributes {stable_mosaic.version = 11 : i64} {
  func.func @kernel(%arg0: i32, %arg1: memref<1x4x256xf32, #tpu.memory_space<vmem>>, %arg2: memref<4x36xf32, #tpu.memory_space<vmem>>, %arg3: memref<4x1xf32, #tpu.memory_space<vmem>>, %arg4: memref<4x36xf32, #tpu.memory_space<vmem>>, %arg5: memref<4x1xf32, #tpu.memory_space<vmem>>, %arg6: memref<3x256xf32, #tpu.memory_space<vmem>>, %arg7: memref<1x4x256xf32, #tpu.memory_space<vmem>>) attributes {dimension_semantics = [#tpu.dimension_semantics<parallel>], iteration_bounds = array<i64: 2>, scalar_prefetch = 0 : i64, scratch_operands = 0 : i64, tpu.core_type = #tpu.core_type<tc>, window_params = [{transform_indices = @transform_0, window_bounds = array<i64: 1, 4, 256>}, {pipeline_mode = #tpu.pipeline_mode<synchronous>, transform_indices = @transform_1, window_bounds = array<i64: 4, 36>}, {pipeline_mode = #tpu.pipeline_mode<synchronous>, transform_indices = @transform_2, window_bounds = array<i64: 4, 1>}, {pipeline_mode = #tpu.pipeline_mode<synchronous>, transform_indices = @transform_3, window_bounds = array<i64: 4, 36>}, {pipeline_mode = #tpu.pipeline_mode<synchronous>, transform_indices = @transform_4, window_bounds = array<i64: 4, 1>}, {pipeline_mode = #tpu.pipeline_mode<synchronous>, transform_indices = @transform_5, window_bounds = array<i64: 3, 256>}, {transform_indices = @transform_6, window_bounds = array<i64: 1, 4, 256>}]} {
    %c0 = arith.constant 0 : index
    %c0_0 = arith.constant 0 : index
    %c0_1 = arith.constant 0 : index
    %0 = vector.load %arg1[%c0, %c0_0, %c0_1] : memref<1x4x256xf32, #tpu.memory_space<vmem>>, vector<1x4x256xf32>
    %1 = vector.shape_cast %0 : vector<1x4x256xf32> to vector<4x256xf32>
    %cst = arith.constant 0.000000e+00 : f32
    %2 = vector.broadcast %cst : f32 to vector<4x17xf32>
    %3 = vector.extract_strided_slice %1 {offsets = [0, 0], sizes = [4, 239], strides = [1, 1]} : vector<4x256xf32> to vector<4x239xf32>
    %4 = tpu.concatenate %2, %3 in 1 : vector<4x17xf32>, vector<4x239xf32> -> vector<4x256xf32>
    %c0_2 = arith.constant 0 : index
    %c0_3 = arith.constant 0 : index
    %5 = vector.load %arg6[%c0_2, %c0_3] : memref<3x256xf32, #tpu.memory_space<vmem>>, vector<1x256xf32>
    %6 = vector.broadcast %5 : vector<1x256xf32> to vector<4x256xf32>
    %7 = arith.mulf %4, %6 : vector<4x256xf32>
    %cst_4 = arith.constant 0.000000e+00 : f32
    %8 = vector.broadcast %cst_4 : f32 to vector<4x16xf32>
    %9 = vector.extract_strided_slice %1 {offsets = [0, 0], sizes = [4, 240], strides = [1, 1]} : vector<4x256xf32> to vector<4x240xf32>
    %10 = tpu.concatenate %8, %9 in 1 : vector<4x16xf32>, vector<4x240xf32> -> vector<4x256xf32>
    %cst_5 = arith.constant 0.000000e+00 : f32
    %11 = vector.broadcast %cst_5 : f32 to vector<4x15xf32>
    %12 = vector.extract_strided_slice %1 {offsets = [0, 0], sizes = [4, 241], strides = [1, 1]} : vector<4x256xf32> to vector<4x241xf32>
    %13 = tpu.concatenate %11, %12 in 1 : vector<4x15xf32>, vector<4x241xf32> -> vector<4x256xf32>
    %c2 = arith.constant 2 : index
    %c0_6 = arith.constant 0 : index
    %14 = vector.load %arg6[%c2, %c0_6] : memref<3x256xf32, #tpu.memory_space<vmem>>, vector<1x256xf32>
    %15 = vector.broadcast %14 : vector<1x256xf32> to vector<4x256xf32>
    %16 = arith.mulf %13, %15 : vector<4x256xf32>
    %cst_7 = arith.constant 0.000000e+00 : f32
    %17 = vector.broadcast %cst_7 : f32 to vector<4x1xf32>
    %18 = vector.extract_strided_slice %1 {offsets = [0, 0], sizes = [4, 255], strides = [1, 1]} : vector<4x256xf32> to vector<4x255xf32>
    %19 = tpu.concatenate %17, %18 in 1 : vector<4x1xf32>, vector<4x255xf32> -> vector<4x256xf32>
    %c0_8 = arith.constant 0 : index
    %c0_9 = arith.constant 0 : index
    %20 = vector.load %arg6[%c0_8, %c0_9] : memref<3x256xf32, #tpu.memory_space<vmem>>, vector<1x256xf32>
    %21 = vector.broadcast %20 : vector<1x256xf32> to vector<4x256xf32>
    %22 = arith.mulf %19, %21 : vector<4x256xf32>
    %23 = vector.extract_strided_slice %1 {offsets = [0, 1], sizes = [4, 255], strides = [1, 1]} : vector<4x256xf32> to vector<4x255xf32>
    %cst_10 = arith.constant 0.000000e+00 : f32
    %24 = vector.broadcast %cst_10 : f32 to vector<4x1xf32>
    %25 = tpu.concatenate %23, %24 in 1 : vector<4x255xf32>, vector<4x1xf32> -> vector<4x256xf32>
    %c2_11 = arith.constant 2 : index
    %c0_12 = arith.constant 0 : index
    %26 = vector.load %arg6[%c2_11, %c0_12] : memref<3x256xf32, #tpu.memory_space<vmem>>, vector<1x256xf32>
    %27 = vector.broadcast %26 : vector<1x256xf32> to vector<4x256xf32>
    %28 = arith.mulf %25, %27 : vector<4x256xf32>
    %29 = vector.extract_strided_slice %1 {offsets = [0, 15], sizes = [4, 241], strides = [1, 1]} : vector<4x256xf32> to vector<4x241xf32>
    %cst_13 = arith.constant 0.000000e+00 : f32
    %30 = vector.broadcast %cst_13 : f32 to vector<4x15xf32>
    %31 = tpu.concatenate %29, %30 in 1 : vector<4x241xf32>, vector<4x15xf32> -> vector<4x256xf32>
    %c0_14 = arith.constant 0 : index
    %c0_15 = arith.constant 0 : index
    %32 = vector.load %arg6[%c0_14, %c0_15] : memref<3x256xf32, #tpu.memory_space<vmem>>, vector<1x256xf32>
    %33 = vector.broadcast %32 : vector<1x256xf32> to vector<4x256xf32>
    %34 = arith.mulf %31, %33 : vector<4x256xf32>
    %35 = vector.extract_strided_slice %1 {offsets = [0, 16], sizes = [4, 240], strides = [1, 1]} : vector<4x256xf32> to vector<4x240xf32>
    %cst_16 = arith.constant 0.000000e+00 : f32
    %36 = vector.broadcast %cst_16 : f32 to vector<4x16xf32>
    %37 = tpu.concatenate %35, %36 in 1 : vector<4x240xf32>, vector<4x16xf32> -> vector<4x256xf32>
    %38 = vector.extract_strided_slice %1 {offsets = [0, 17], sizes = [4, 239], strides = [1, 1]} : vector<4x256xf32> to vector<4x239xf32>
    %cst_17 = arith.constant 0.000000e+00 : f32
    %39 = vector.broadcast %cst_17 : f32 to vector<4x17xf32>
    %40 = tpu.concatenate %38, %39 in 1 : vector<4x239xf32>, vector<4x17xf32> -> vector<4x256xf32>
    %c2_18 = arith.constant 2 : index
    %c0_19 = arith.constant 0 : index
    %41 = vector.load %arg6[%c2_18, %c0_19] : memref<3x256xf32, #tpu.memory_space<vmem>>, vector<1x256xf32>
    %42 = vector.broadcast %41 : vector<1x256xf32> to vector<4x256xf32>
    %43 = arith.mulf %40, %42 : vector<4x256xf32>
    %44 = tpu.concatenate %7, %10, %16, %22, %1, %28, %34, %37, %43 in 0 : vector<4x256xf32>, vector<4x256xf32>, vector<4x256xf32>, vector<4x256xf32>, vector<4x256xf32>, vector<4x256xf32>, vector<4x256xf32>, vector<4x256xf32>, vector<4x256xf32> -> vector<36x256xf32>
    %c0_20 = arith.constant 0 : index
    %c0_21 = arith.constant 0 : index
    %45 = vector.load %arg2[%c0_20, %c0_21] : memref<4x36xf32, #tpu.memory_space<vmem>>, vector<4x36xf32>
    %cst_22 = arith.constant dense<0.000000e+00> : vector<4x256xf32>
    %46 = tpu.matmul %45, %44, %cst_22 {dimension_numbers = #tpu.dot_dimension_numbers<[1], [0], [0], [1], [0, 0, 1, 1], [], []>} : vector<4x36xf32>, vector<36x256xf32>, vector<4x256xf32> -> vector<4x256xf32>
    %c0_23 = arith.constant 0 : index
    %c0_24 = arith.constant 0 : index
    %47 = vector.load %arg3[%c0_23, %c0_24] : memref<4x1xf32, #tpu.memory_space<vmem>>, vector<4x1xf32>
    %48 = vector.broadcast %47 : vector<4x1xf32> to vector<4x256xf32>
    %49 = arith.addf %46, %48 : vector<4x256xf32>
    %cst_25 = arith.constant 0.000000e+00 : f32
    %50 = vector.broadcast %cst_25 : f32 to vector<4x256xf32>
    %51 = arith.maximumf %49, %50 : vector<4x256xf32>
    %cst_26 = arith.constant 0.000000e+00 : f32
    %52 = vector.broadcast %cst_26 : f32 to vector<4x17xf32>
    %53 = vector.extract_strided_slice %51 {offsets = [0, 0], sizes = [4, 239], strides = [1, 1]} : vector<4x256xf32> to vector<4x239xf32>
    %54 = tpu.concatenate %52, %53 in 1 : vector<4x17xf32>, vector<4x239xf32> -> vector<4x256xf32>
    %c0_27 = arith.constant 0 : index
    %c0_28 = arith.constant 0 : index
    %55 = vector.load %arg6[%c0_27, %c0_28] : memref<3x256xf32, #tpu.memory_space<vmem>>, vector<1x256xf32>
    %56 = vector.broadcast %55 : vector<1x256xf32> to vector<4x256xf32>
    %57 = arith.mulf %54, %56 : vector<4x256xf32>
    %cst_29 = arith.constant 0.000000e+00 : f32
    %58 = vector.broadcast %cst_29 : f32 to vector<4x16xf32>
    %59 = vector.extract_strided_slice %51 {offsets = [0, 0], sizes = [4, 240], strides = [1, 1]} : vector<4x256xf32> to vector<4x240xf32>
    %60 = tpu.concatenate %58, %59 in 1 : vector<4x16xf32>, vector<4x240xf32> -> vector<4x256xf32>
    %cst_30 = arith.constant 0.000000e+00 : f32
    %61 = vector.broadcast %cst_30 : f32 to vector<4x15xf32>
    %62 = vector.extract_strided_slice %51 {offsets = [0, 0], sizes = [4, 241], strides = [1, 1]} : vector<4x256xf32> to vector<4x241xf32>
    %63 = tpu.concatenate %61, %62 in 1 : vector<4x15xf32>, vector<4x241xf32> -> vector<4x256xf32>
    %c2_31 = arith.constant 2 : index
    %c0_32 = arith.constant 0 : index
    %64 = vector.load %arg6[%c2_31, %c0_32] : memref<3x256xf32, #tpu.memory_space<vmem>>, vector<1x256xf32>
    %65 = vector.broadcast %64 : vector<1x256xf32> to vector<4x256xf32>
    %66 = arith.mulf %63, %65 : vector<4x256xf32>
    %cst_33 = arith.constant 0.000000e+00 : f32
    %67 = vector.broadcast %cst_33 : f32 to vector<4x1xf32>
    %68 = vector.extract_strided_slice %51 {offsets = [0, 0], sizes = [4, 255], strides = [1, 1]} : vector<4x256xf32> to vector<4x255xf32>
    %69 = tpu.concatenate %67, %68 in 1 : vector<4x1xf32>, vector<4x255xf32> -> vector<4x256xf32>
    %c0_34 = arith.constant 0 : index
    %c0_35 = arith.constant 0 : index
    %70 = vector.load %arg6[%c0_34, %c0_35] : memref<3x256xf32, #tpu.memory_space<vmem>>, vector<1x256xf32>
    %71 = vector.broadcast %70 : vector<1x256xf32> to vector<4x256xf32>
    %72 = arith.mulf %69, %71 : vector<4x256xf32>
    %73 = vector.extract_strided_slice %51 {offsets = [0, 1], sizes = [4, 255], strides = [1, 1]} : vector<4x256xf32> to vector<4x255xf32>
    %cst_36 = arith.constant 0.000000e+00 : f32
    %74 = vector.broadcast %cst_36 : f32 to vector<4x1xf32>
    %75 = tpu.concatenate %73, %74 in 1 : vector<4x255xf32>, vector<4x1xf32> -> vector<4x256xf32>
    %c2_37 = arith.constant 2 : index
    %c0_38 = arith.constant 0 : index
    %76 = vector.load %arg6[%c2_37, %c0_38] : memref<3x256xf32, #tpu.memory_space<vmem>>, vector<1x256xf32>
    %77 = vector.broadcast %76 : vector<1x256xf32> to vector<4x256xf32>
    %78 = arith.mulf %75, %77 : vector<4x256xf32>
    %79 = vector.extract_strided_slice %51 {offsets = [0, 15], sizes = [4, 241], strides = [1, 1]} : vector<4x256xf32> to vector<4x241xf32>
    %cst_39 = arith.constant 0.000000e+00 : f32
    %80 = vector.broadcast %cst_39 : f32 to vector<4x15xf32>
    %81 = tpu.concatenate %79, %80 in 1 : vector<4x241xf32>, vector<4x15xf32> -> vector<4x256xf32>
    %c0_40 = arith.constant 0 : index
    %c0_41 = arith.constant 0 : index
    %82 = vector.load %arg6[%c0_40, %c0_41] : memref<3x256xf32, #tpu.memory_space<vmem>>, vector<1x256xf32>
    %83 = vector.broadcast %82 : vector<1x256xf32> to vector<4x256xf32>
    %84 = arith.mulf %81, %83 : vector<4x256xf32>
    %85 = vector.extract_strided_slice %51 {offsets = [0, 16], sizes = [4, 240], strides = [1, 1]} : vector<4x256xf32> to vector<4x240xf32>
    %cst_42 = arith.constant 0.000000e+00 : f32
    %86 = vector.broadcast %cst_42 : f32 to vector<4x16xf32>
    %87 = tpu.concatenate %85, %86 in 1 : vector<4x240xf32>, vector<4x16xf32> -> vector<4x256xf32>
    %88 = vector.extract_strided_slice %51 {offsets = [0, 17], sizes = [4, 239], strides = [1, 1]} : vector<4x256xf32> to vector<4x239xf32>
    %cst_43 = arith.constant 0.000000e+00 : f32
    %89 = vector.broadcast %cst_43 : f32 to vector<4x17xf32>
    %90 = tpu.concatenate %88, %89 in 1 : vector<4x239xf32>, vector<4x17xf32> -> vector<4x256xf32>
    %c2_44 = arith.constant 2 : index
    %c0_45 = arith.constant 0 : index
    %91 = vector.load %arg6[%c2_44, %c0_45] : memref<3x256xf32, #tpu.memory_space<vmem>>, vector<1x256xf32>
    %92 = vector.broadcast %91 : vector<1x256xf32> to vector<4x256xf32>
    %93 = arith.mulf %90, %92 : vector<4x256xf32>
    %94 = tpu.concatenate %57, %60, %66, %72, %51, %78, %84, %87, %93 in 0 : vector<4x256xf32>, vector<4x256xf32>, vector<4x256xf32>, vector<4x256xf32>, vector<4x256xf32>, vector<4x256xf32>, vector<4x256xf32>, vector<4x256xf32>, vector<4x256xf32> -> vector<36x256xf32>
    %c0_46 = arith.constant 0 : index
    %c0_47 = arith.constant 0 : index
    %95 = vector.load %arg4[%c0_46, %c0_47] : memref<4x36xf32, #tpu.memory_space<vmem>>, vector<4x36xf32>
    %cst_48 = arith.constant dense<0.000000e+00> : vector<4x256xf32>
    %96 = tpu.matmul %95, %94, %cst_48 {dimension_numbers = #tpu.dot_dimension_numbers<[1], [0], [0], [1], [0, 0, 1, 1], [], []>} : vector<4x36xf32>, vector<36x256xf32>, vector<4x256xf32> -> vector<4x256xf32>
    %c0_49 = arith.constant 0 : index
    %c0_50 = arith.constant 0 : index
    %97 = vector.load %arg5[%c0_49, %c0_50] : memref<4x1xf32, #tpu.memory_space<vmem>>, vector<4x1xf32>
    %98 = vector.broadcast %97 : vector<4x1xf32> to vector<4x256xf32>
    %99 = arith.addf %96, %98 : vector<4x256xf32>
    %100 = arith.addf %99, %1 : vector<4x256xf32>
    %cst_51 = arith.constant 0.000000e+00 : f32
    %101 = vector.broadcast %cst_51 : f32 to vector<4x256xf32>
    %102 = arith.maximumf %100, %101 : vector<4x256xf32>
    %c0_52 = arith.constant 0 : index
    %c0_53 = arith.constant 0 : index
    %c0_54 = arith.constant 0 : index
    %103 = vector.load %arg7[%c0_52, %c0_53, %c0_54] : memref<1x4x256xf32, #tpu.memory_space<vmem>>, vector<1x4x256xf32>
    %104 = vector.shape_cast %103 : vector<1x4x256xf32> to vector<4x256xf32>
    %105 = vector.shape_cast %102 : vector<4x256xf32> to vector<1x4x256xf32>
    tpu.vector_store %arg7[%c0_52, %c0_53, %c0_54], %105 {strides = array<i32>} : memref<1x4x256xf32, #tpu.memory_space<vmem>>, vector<1x4x256xf32>,
    return
  }
  func.func @transform_0(%arg0: i32) -> (i32, i32, i32) {
    %c0_i32 = arith.constant 0 : i32
    %c0_i32_0 = arith.constant 0 : i32
    %c0_i32_1 = arith.constant 0 : i32
    return %arg0, %c0_i32, %c0_i32_0 : i32, i32, i32
  }
  func.func @transform_1(%arg0: i32) -> (i32, i32) {
    %c0_i32 = arith.constant 0 : i32
    %c0_i32_0 = arith.constant 0 : i32
    %c0_i32_1 = arith.constant 0 : i32
    return %c0_i32, %c0_i32_0 : i32, i32
  }
  func.func @transform_2(%arg0: i32) -> (i32, i32) {
    %c0_i32 = arith.constant 0 : i32
    %c0_i32_0 = arith.constant 0 : i32
    %c0_i32_1 = arith.constant 0 : i32
    return %c0_i32, %c0_i32_0 : i32, i32
  }
  func.func @transform_3(%arg0: i32) -> (i32, i32) {
    %c0_i32 = arith.constant 0 : i32
    %c0_i32_0 = arith.constant 0 : i32
    %c0_i32_1 = arith.constant 0 : i32
    return %c0_i32, %c0_i32_0 : i32, i32
  }
  func.func @transform_4(%arg0: i32) -> (i32, i32) {
    %c0_i32 = arith.constant 0 : i32
    %c0_i32_0 = arith.constant 0 : i32
    %c0_i32_1 = arith.constant 0 : i32
    return %c0_i32, %c0_i32_0 : i32, i32
  }
  func.func @transform_5(%arg0: i32) -> (i32, i32) {
    %c0_i32 = arith.constant 0 : i32
    %c0_i32_0 = arith.constant 0 : i32
    %c0_i32_1 = arith.constant 0 : i32
    return %c0_i32, %c0_i32_0 : i32, i32
  }
  func.func @transform_6(%arg0: i32) -> (i32, i32, i32) {
    %c0_i32 = arith.constant 0 : i32
    %c0_i32_0 = arith.constant 0 : i32
    %c0_i32_1 = arith.constant 0 : i32
    return %arg0, %c0_i32, %c0_i32_0 : i32, i32, i32
  }
}

</mosaic_0001>

<llo_original>
// kernel: tpu_custom_call.1
$region0: #{tpu_custom_call.1}
  #allocation0 [shape = 'u32[]', space=smem, size = 0x4, offset = 0x4, fixed_abs, tag = 'smem constant byte address 0x4 - core index']
  #allocation1 [shape = 'u32[72,128]{1,0:T(1,128)}', space=vmem, size = 0x9000, scoped, tag = 'internal scratch']
  %s0 = inlined_call_operand.hbm [shape: f32[2,4,256], index: 0, kind: input, shape index: {}]
  %s1 = inlined_call_operand.hbm [shape: f32[4,36], index: 1, kind: input, shape index: {}]
  %s2 = inlined_call_operand.vmem [shape: f32[4,1], index: 2, kind: input, shape index: {}]
  %s3 = inlined_call_operand.hbm [shape: f32[4,36], index: 3, kind: input, shape index: {}]
  %s4 = inlined_call_operand.vmem [shape: f32[4,1], index: 4, kind: input, shape index: {}]
  %s5 = inlined_call_operand.vmem [shape: f32[3,256], index: 5, kind: input, shape index: {}]
  %s6 = inlined_call_operand.hbm [shape: f32[2,4,256], index: 6, kind: output, shape index: {}]
  %s7 = sld [smem:[#allocation0]]
  $region69: #{tpu_custom_call.1} parent=0
    _
  %s9 = ssub.s32 1, %s7
  %s10 = scalar_select 0, %s9, %s7
  $region1: #{tpu_custom_call.1} parent=0
    #allocation2 [shape = 'u8[8192]{0}', space=vmem, size = 0x2000, scoped, tag = 'input window, operand 0']
    #allocation3 [shape = 's32[2]{0}', space=sflag, size = 0x8, scoped, tag = 'scoped memory for tpu_custom_call.1']
    #allocation4 [shape = 's32[2]{0}', space=sflag, size = 0x8, scoped, tag = 'scoped memory for tpu_custom_call.1']
    #allocation5 [shape = 'u8[2048]{0}', space=vmem, size = 0x800, scoped, tag = 'input window, operand 1, single buffered']
    #allocation6 [shape = 's32[1]{0}', space=sflag, size = 0x4, scoped, tag = 'scoped memory for tpu_custom_call.1']
    #allocation7 [shape = 'u8[2048]{0}', space=vmem, size = 0x800, scoped, tag = 'input window, operand 3, single buffered']
    #allocation8 [shape = 'u8[8192]{0}', space=vmem, size = 0x2000, scoped, tag = 'output window, operand 0']
    %11 = vsyncpa [#allocation3], 0
    %s12 = scalar_lea.sflag [#allocation3], 1
    %13 = vsyncpa %s12, 0
    %14 = vsyncpa [#allocation6], 0
    %15 = vsyncpa [#allocation4], 0
    %s16 = scalar_lea.sflag [#allocation4], 1
    %17 = vsyncpa %s16, 0
    loop: start=0, step=1, limit=4
    $region2: #{tpu_custom_call.1} parent=1 // loop_pre_header
      _
    $region3: #{tpu_custom_call.1} parent=1 // loop_header
      %s19 = sphi 0, %s23
      %p20 = scmp.ge.s32.totalorder %s19, 4
      %s29 = sphi 0, %s31
      %s32 = sphi 0, %s29
      %s33 = sphi 0, %s32
      %s49 = sphi 0, %s33
      %s53 = sphi 0, %s53
      %s55 = sphi 0, %s53
      %s56 = sphi 0, %s55
      %s70 = sphi 0, %s56
      %s74 = sphi 0, %s74
      %s76 = sphi 0, %s74
      %s77 = sphi 0, %s76
      %s91 = sphi 0, %s77
      %s95 = sphi 0, %s95
      %s97 = sphi 0, %s95
      %s98 = sphi 0, %s97
      %s112 = sphi 0, %s98
      %s116 = sphi 0, %s116
      %s118 = sphi 0, %s116
      %s119 = sphi 0, %s118
      %s133 = sphi 0, %s119
      %s137 = sphi 0, %s137
      %s139 = sphi 0, %s137
      %s140 = sphi 0, %s139
      %s154 = sphi 0, %s140
      %s160 = sphi 0, %s162
      %s163 = sphi 0, %s160
      %s164 = sphi 0, %s163
      %s180 = sphi 0, %s164
    $region4: #{tpu_custom_call.1} parent=1 // loop_header_branch
      %22 = sbr.rel (%p20) target = $region8
    $region5: #{tpu_custom_call.1} parent=1 // loop_body
      %s24 = ssub.s32 %s19, 1
      %s25 = ssub.s32 %s19, 2
      %s26 = sadd.s32 %s19, 1
      %s27 = ssub.s32 %s19, %s26
      %p28 = scmp.eq.s32.totalorder %s27, 0
      %s30 = sadd.s32 %s29, 1
      %s31 = scalar_select %p28, %s29, %s30
      %p34 = pneg %p28
      %p35 = scmp.eq.s32.totalorder %s19, 1
      %p36 = por %p34, %p35
      %p37 = scmp.ne.s32.totalorder %s29, %s32
      %p38 = scmp.eq.s32.totalorder %s19, 0
      %p39 = por %p37, %p38
      %p40 = scmp.ne.s32.totalorder %s29, %s32
      %p41 = scmp.eq.s32.totalorder %s24, 1
      %p42 = por %p40, %p41
      %p43 = scmp.ne.s32.totalorder %s32, %s33
      %p44 = scmp.eq.s32.totalorder %s24, 0
      %p45 = por %p43, %p44
      %p46 = scmp.ne.s32.totalorder %s32, %s33
      %p47 = scmp.eq.s32.totalorder %s25, 1
      %p48 = por %p46, %p47
      %p50 = scmp.ne.s32.totalorder %s33, %s49
      %p51 = scmp.eq.s32.totalorder %s25, 0
      %p52 = por %p50, %p51
      %s54 = sadd.s32 %s53, 1
      %p57 = scmp.eq.s32.totalorder %s19, 1
      %p58 = scmp.ne.s32.totalorder %s53, %s55
      %p59 = scmp.eq.s32.totalorder %s19, 0
      %p60 = por %p58, %p59
      %p61 = scmp.ne.s32.totalorder %s53, %s55
      %p62 = scmp.eq.s32.totalorder %s24, 1
      %p63 = por %p61, %p62
      %p64 = scmp.ne.s32.totalorder %s55, %s56
      %p65 = scmp.eq.s32.totalorder %s24, 0
      %p66 = por %p64, %p65
      %p67 = scmp.ne.s32.totalorder %s55, %s56
      %p68 = scmp.eq.s32.totalorder %s25, 1
      %p69 = por %p67, %p68
      %p71 = scmp.ne.s32.totalorder %s56, %s70
      %p72 = scmp.eq.s32.totalorder %s25, 0
      %p73 = por %p71, %p72
      %s75 = sadd.s32 %s74, 1
      %p78 = scmp.eq.s32.totalorder %s19, 1
      %p79 = scmp.ne.s32.totalorder %s74, %s76
      %p80 = scmp.eq.s32.totalorder %s19, 0
      %p81 = por %p79, %p80
      %p82 = scmp.ne.s32.totalorder %s74, %s76
      %p83 = scmp.eq.s32.totalorder %s24, 1
      %p84 = por %p82, %p83
      %p85 = scmp.ne.s32.totalorder %s76, %s77
      %p86 = scmp.eq.s32.totalorder %s24, 0
      %p87 = por %p85, %p86
      %p88 = scmp.ne.s32.totalorder %s76, %s77
      %p89 = scmp.eq.s32.totalorder %s25, 1
      %p90 = por %p88, %p89
      %p92 = scmp.ne.s32.totalorder %s77, %s91
      %p93 = scmp.eq.s32.totalorder %s25, 0
      %p94 = por %p92, %p93
      %s96 = sadd.s32 %s95, 1
      %p99 = scmp.eq.s32.totalorder %s19, 1
      %p100 = scmp.ne.s32.totalorder %s95, %s97
      %p101 = scmp.eq.s32.totalorder %s19, 0
      %p102 = por %p100, %p101
      %p103 = scmp.ne.s32.totalorder %s95, %s97
      %p104 = scmp.eq.s32.totalorder %s24, 1
      %p105 = por %p103, %p104
      %p106 = scmp.ne.s32.totalorder %s97, %s98
      %p107 = scmp.eq.s32.totalorder %s24, 0
      %p108 = por %p106, %p107
      %p109 = scmp.ne.s32.totalorder %s97, %s98
      %p110 = scmp.eq.s32.totalorder %s25, 1
      %p111 = por %p109, %p110
      %p113 = scmp.ne.s32.totalorder %s98, %s112
      %p114 = scmp.eq.s32.totalorder %s25, 0
      %p115 = por %p113, %p114
      %s117 = sadd.s32 %s116, 1
      %p120 = scmp.eq.s32.totalorder %s19, 1
      %p121 = scmp.ne.s32.totalorder %s116, %s118
      %p122 = scmp.eq.s32.totalorder %s19, 0
      %p123 = por %p121, %p122
      %p124 = scmp.ne.s32.totalorder %s116, %s118
      %p125 = scmp.eq.s32.totalorder %s24, 1
      %p126 = por %p124, %p125
      %p127 = scmp.ne.s32.totalorder %s118, %s119
      %p128 = scmp.eq.s32.totalorder %s24, 0
      %p129 = por %p127, %p128
      %p130 = scmp.ne.s32.totalorder %s118, %s119
      %p131 = scmp.eq.s32.totalorder %s25, 1
      %p132 = por %p130, %p131
      %p134 = scmp.ne.s32.totalorder %s119, %s133
      %p135 = scmp.eq.s32.totalorder %s25, 0
      %p136 = por %p134, %p135
      %s138 = sadd.s32 %s137, 1
      %p141 = scmp.eq.s32.totalorder %s19, 1
      %p142 = scmp.ne.s32.totalorder %s137, %s139
      %p143 = scmp.eq.s32.totalorder %s19, 0
      %p144 = por %p142, %p143
      %p145 = scmp.ne.s32.totalorder %s137, %s139
      %p146 = scmp.eq.s32.totalorder %s24, 1
      %p147 = por %p145, %p146
      %p148 = scmp.ne.s32.totalorder %s139, %s140
      %p149 = scmp.eq.s32.totalorder %s24, 0
      %p150 = por %p148, %p149
      %p151 = scmp.ne.s32.totalorder %s139, %s140
      %p152 = scmp.eq.s32.totalorder %s25, 1
      %p153 = por %p151, %p152
      %p155 = scmp.ne.s32.totalorder %s140, %s154
      %p156 = scmp.eq.s32.totalorder %s25, 0
      %p157 = por %p155, %p156
      %s158 = ssub.s32 %s19, %s26
      %p159 = scmp.eq.s32.totalorder %s158, 0
      %s161 = sadd.s32 %s160, 1
      %s162 = scalar_select %p159, %s160, %s161
      %p165 = pneg %p159
      %p166 = scmp.eq.s32.totalorder %s19, 1
      %p167 = por %p165, %p166
      %p168 = scmp.ne.s32.totalorder %s160, %s163
      %p169 = scmp.eq.s32.totalorder %s19, 0
      %p170 = por %p168, %p169
      %p171 = scmp.ne.s32.totalorder %s160, %s163
      %p172 = scmp.eq.s32.totalorder %s24, 1
      %p173 = por %p171, %p172
      %p174 = scmp.ne.s32.totalorder %s163, %s164
      %p175 = scmp.eq.s32.totalorder %s24, 0
      %p176 = por %p174, %p175
      %p177 = scmp.ne.s32.totalorder %s163, %s164
      %p178 = scmp.eq.s32.totalorder %s25, 1
      %p179 = por %p177, %p178
      %p181 = scmp.ne.s32.totalorder %s164, %s180
      %p182 = scmp.eq.s32.totalorder %s25, 0
      %p183 = por %p181, %p182
      %p184 = scmp.le.s32.totalorder 1, %s19
      %p185 = scmp.lt.s32.totalorder %s19, 3
      %p186 = pnand %p184, %p185
      %p187 = pneg %p186
      // Predicated region
      $region9: #{tpu_custom_call.1} parent=5 // pred_check
        _
      $region10: #{tpu_custom_call.1} parent=5 // pred_check_branch
        %189 = sbr.rel (%p186) target = $region12
      $region11: #{tpu_custom_call.1} parent=5 // pred_region
        %s190 = ssub.s32 %s19, 1
        // Predicated region
        $region13: #{tpu_custom_call.1} parent=11 // pred_check
          %p191 = pneg %p66
        $region14: #{tpu_custom_call.1} parent=11 // pred_check_branch
          %193 = sbr.rel (%p191) target = $region16
        $region15: #{tpu_custom_call.1} parent=11 // pred_region
          %195 = vsyncadd [#allocation6], 0
          %s197 = sshll.u32 %s1, 4
          %s198 = int_to_ptr.hbm [resolvable:$true] %s197
          %s199 = sshll.u32 [#allocation5], 4
          %s200 = int_to_ptr.vmem [resolvable:$true] %s199
          %202 = dma.hbm_to_vmem [thread:$0]  %s198, 64, %s200, [#allocation6]
        $region16: #{tpu_custom_call.1} parent=11 // pred_fallthru
          _
        // Predicated region
        $region17: #{tpu_custom_call.1} parent=11 // pred_check
          %p203 = pneg %p87
        $region18: #{tpu_custom_call.1} parent=11 // pred_check_branch
          %205 = sbr.rel (%p203) target = $region20
        $region19: #{tpu_custom_call.1} parent=11 // pred_region
          _
        $region20: #{tpu_custom_call.1} parent=11 // pred_fallthru
          _
        // Predicated region
        $region21: #{tpu_custom_call.1} parent=11 // pred_check
          %p206 = pneg %p108
        $region22: #{tpu_custom_call.1} parent=11 // pred_check_branch
          %208 = sbr.rel (%p206) target = $region24
        $region23: #{tpu_custom_call.1} parent=11 // pred_region
          %210 = vsyncadd [#allocation6], 0
          %s212 = sshll.u32 %s3, 4
          %s213 = int_to_ptr.hbm [resolvable:$true] %s212
          %s214 = sshll.u32 [#allocation7], 4
          %s215 = int_to_ptr.vmem [resolvable:$true] %s214
          %217 = dma.hbm_to_vmem [thread:$0]  %s213, 64, %s215, [#allocation6]
        $region24: #{tpu_custom_call.1} parent=11 // pred_fallthru
          _
        // Predicated region
        $region25: #{tpu_custom_call.1} parent=11 // pred_check
          %p218 = pneg %p129
        $region26: #{tpu_custom_call.1} parent=11 // pred_check_branch
          %220 = sbr.rel (%p218) target = $region28
        $region27: #{tpu_custom_call.1} parent=11 // pred_region
          _
        $region28: #{tpu_custom_call.1} parent=11 // pred_fallthru
          _
        // Predicated region
        $region29: #{tpu_custom_call.1} parent=11 // pred_check
          %p221 = pneg %p150
        $region30: #{tpu_custom_call.1} parent=11 // pred_check_branch
          %223 = sbr.rel (%p221) target = $region32
        $region31: #{tpu_custom_call.1} parent=11 // pred_region
          _
        $region32: #{tpu_custom_call.1} parent=11 // pred_fallthru
          _
      $region12: #{tpu_custom_call.1} parent=5 // pred_fallthru
        _
      %p224 = scmp.lt.s32.totalorder %s19, 2
      // Predicated region
      $region33: #{tpu_custom_call.1} parent=5 // pred_check
        %p225 = pneg %p224
      $region34: #{tpu_custom_call.1} parent=5 // pred_check_branch
        %227 = sbr.rel (%p225) target = $region36
      $region35: #{tpu_custom_call.1} parent=5 // pred_region
        // Predicated region
        $region37: #{tpu_custom_call.1} parent=35 // pred_check
          %p228 = pneg %p39
        $region38: #{tpu_custom_call.1} parent=35 // pred_check_branch
          %230 = sbr.rel (%p228) target = $region40
        $region39: #{tpu_custom_call.1} parent=35 // pred_region
          %s231 = sand.u32 %s29, 1
          %s232 = scalar_lea.sflag [#allocation3], %s231
          %s233 = sand.u32 %s29, 1
          %s234 = smul.addr %s233, 8
          %s235 = scalar_lea.vmem [#allocation2], %s234
          %237 = vsyncadd %s232, 0
          %s238 = smul.addr %s19, 2
          %s239 = smul.addr %s238, 4
          %s240 = scalar_lea.hbm %s0, %s239
          %s242 = sshll.u32 %s240, 4
          %s243 = int_to_ptr.hbm [resolvable:$true] %s242
          %s244 = sshll.u32 %s235, 4
          %s245 = int_to_ptr.vmem [resolvable:$true] %s244
          %247 = dma.hbm_to_vmem [thread:$0]  %s243, 128, %s245, %s232
        $region40: #{tpu_custom_call.1} parent=35 // pred_fallthru
          _
      $region36: #{tpu_custom_call.1} parent=5 // pred_fallthru
        _
      %p248 = scmp.le.s32.totalorder 1, %s19
      %p249 = scmp.lt.s32.totalorder %s19, 3
      %p250 = pnand %p248, %p249
      %p251 = pneg %p250
      // Predicated region
      $region41: #{tpu_custom_call.1} parent=5 // pred_check
        _
      $region42: #{tpu_custom_call.1} parent=5 // pred_check_branch
        %253 = sbr.rel (%p250) target = $region44
      $region43: #{tpu_custom_call.1} parent=5 // pred_region
        %s254 = ssub.s32 %s19, 1
        %s255 = sand.u32 %s32, 1
        %s256 = scalar_lea.sflag [#allocation3], %s255
        %s257 = sand.u32 %s32, 1
        %s258 = smul.addr %s257, 8
        %s259 = scalar_lea.vmem [#allocation2], %s258
        // Predicated region
        $region45: #{tpu_custom_call.1} parent=43 // pred_check
          %p260 = pneg %p45
        $region46: #{tpu_custom_call.1} parent=43 // pred_check_branch
          %262 = sbr.rel (%p260) target = $region48
        $region47: #{tpu_custom_call.1} parent=43 // pred_region
          %264 = dma.done %s256, 128
        $region48: #{tpu_custom_call.1} parent=43 // pred_fallthru
          _
        // Predicated region
        $region49: #{tpu_custom_call.1} parent=43 // pred_check
          %p265 = pneg %p66
        $region50: #{tpu_custom_call.1} parent=43 // pred_check_branch
          %267 = sbr.rel (%p265) target = $region52
        $region51: #{tpu_custom_call.1} parent=43 // pred_region
          %269 = dma.done [#allocation6], 64
        $region52: #{tpu_custom_call.1} parent=43 // pred_fallthru
          _
        // Predicated region
        $region53: #{tpu_custom_call.1} parent=43 // pred_check
          %p270 = pneg %p108
        $region54: #{tpu_custom_call.1} parent=43 // pred_check_branch
          %272 = sbr.rel (%p270) target = $region56
        $region55: #{tpu_custom_call.1} parent=43 // pred_region
          %274 = dma.done [#allocation6], 64
        $region56: #{tpu_custom_call.1} parent=43 // pred_fallthru
          _
        %s275 = sand.u32 %s32, 1
        %s276 = scalar_lea.sflag [#allocation3], %s275
        %s277 = sand.u32 %s32, 1
        %s278 = smul.addr %s277, 8
        %s279 = scalar_lea.vmem [#allocation2], %s278
        %p280 = pneg %p45
        %p281 = pneg %p42
        %p282 = pneg %p66
        %p283 = pneg %p63
        %p284 = pneg %p87
        %p285 = pneg %p84
        %p286 = pneg %p108
        %p287 = pneg %p105
        %p288 = pneg %p129
        %p289 = pneg %p126
        %p290 = pneg %p150
        %p291 = pneg %p147
        %p292 = pneg %p176
        %p293 = pneg %p173
        %s294 = sand.u32 %s163, 1
        %s295 = scalar_lea.sflag [#allocation4], %s294
        %s296 = sand.u32 %s163, 1
        %s297 = smul.addr %s296, 8
        %s298 = scalar_lea.vmem [#allocation8], %s297
        %v299 = vld [vmem:[%s259] sm:$0xff]
        %301 = vst [vmem:[#allocation1] ss:$2 sm:$0xff] %v299
        %v302 = vld.sshfl [vmem:[#allocation1] sm:$0xff pattern:$0x75316420]
        %v303 = vld.sshfl [vmem:[#allocation1 + $0x8] sm:$0xff pattern:$0x75316420]
        %304 = vrot.lane.b32.xlu0 %v302, 17
        %v305 = vpop.permute.xlu0 %304
        %306 = vrot.lane.b32.xlu0 %v303, 17
        %v307 = vpop.permute.xlu0 %306
        %vm308 = vcmask 138240
        %v309 = vsel %vm308, %v305, %v307
        %v312 = vsel %vm308, 0.0, %v305
        %v313 = vld [vmem:[%s5] ss:$4 sm:$0x3]
        %v315 = vperm.slane %v313, 0
        %v316 = vperm.slane %v313, 1
        %v319 = vmul.f32 %v312, %v315
        %v320 = vmul.f32 %v309, %v316
        %321 = vst [vmem:[#allocation1] ss:$2 sm:$0xff] %v299
        %v322 = vld.sshfl [vmem:[#allocation1] sm:$0xff pattern:$0x75316420]
        %v323 = vld.sshfl [vmem:[#allocation1 + $0x8] sm:$0xff pattern:$0x75316420]
        %324 = vrot.lane.b32.xlu0 %v322, 16
        %v325 = vpop.permute.xlu0 %324
        %326 = vrot.lane.b32.xlu0 %v323, 16
        %v327 = vpop.permute.xlu0 %326
        %vm328 = vcmask 130048
        %v329 = vsel %vm328, %v325, %v327
        %v331 = vsel %vm328, 0.0, %v325
        %332 = vst [vmem:[#allocation1] ss:$2 sm:$0xff] %v299
        %v333 = vld.sshfl [vmem:[#allocation1] sm:$0xff pattern:$0x75316420]
        %v334 = vld.sshfl [vmem:[#allocation1 + $0x8] sm:$0xff pattern:$0x75316420]
        %335 = vrot.lane.b32.xlu0 %v333, 15
        %v336 = vpop.permute.xlu0 %335
        %337 = vrot.lane.b32.xlu0 %v334, 15
        %v338 = vpop.permute.xlu0 %337
        %vm339 = vcmask 121856
        %v340 = vsel %vm339, %v336, %v338
        %v343 = vsel %vm339, 0.0, %v336
        %s344 = scalar_lea.vmem %s5, 2
        %v345 = vld [vmem:[%s344] ss:$4 sm:$0x3]
        %v347 = vperm.slane %v345, 0
        %v348 = vperm.slane %v345, 1
        %v351 = vmul.f32 %v343, %v347
        %v352 = vmul.f32 %v340, %v348
        %353 = vst [vmem:[#allocation1] ss:$2 sm:$0xff] %v299
        %v354 = vld.sshfl [vmem:[#allocation1] sm:$0xff pattern:$0x75316420]
        %v355 = vld.sshfl [vmem:[#allocation1 + $0x8] sm:$0xff pattern:$0x75316420]
        %356 = vrot.lane.b32.xlu0 %v354, 1
        %v357 = vpop.permute.xlu0 %356
        %358 = vrot.lane.b32.xlu0 %v355, 1
        %v359 = vpop.permute.xlu0 %358
        %vm360 = vcmask 7168
        %v361 = vsel %vm360, %v357, %v359
        %v364 = vsel %vm360, 0.0, %v357
        %v365 = vmul.f32 %v364, %v315
        %v366 = vmul.f32 %v361, %v316
        %367 = vst [vmem:[#allocation1] ss:$2 sm:$0xff] %v299
        %v368 = vld.sshfl [vmem:[#allocation1] sm:$0xff pattern:$0x75316420]
        %v369 = vld.sshfl [vmem:[#allocation1 + $0x8] sm:$0xff pattern:$0x75316420]
        %370 = vrot.lane.b32.xlu0 %v368, 127
        %v371 = vpop.permute.xlu0 %370
        %372 = vrot.lane.b32.xlu0 %v369, 127
        %v373 = vpop.permute.xlu0 %372
        %vm374 = vcmask 1039360
        %v375 = vsel %vm374, %v371, %v373
        %v378 = vsel %vm374, %v373, 0.0
        %v379 = vmul.f32 %v375, %v347
        %v380 = vmul.f32 %v378, %v348
        %381 = vst [vmem:[#allocation1] ss:$2 sm:$0xff] %v299
        %v382 = vld.sshfl [vmem:[#allocation1] sm:$0xff pattern:$0x75316420]
        %v383 = vld.sshfl [vmem:[#allocation1 + $0x8] sm:$0xff pattern:$0x75316420]
        %384 = vrot.lane.b32.xlu0 %v382, 113
        %v385 = vpop.permute.xlu0 %384
        %386 = vrot.lane.b32.xlu0 %v383, 113
        %v387 = vpop.permute.xlu0 %386
        %vm388 = vcmask 924672
        %v389 = vsel %vm388, %v385, %v387
        %v392 = vsel %vm388, %v387, 0.0
        %v393 = vmul.f32 %v389, %v315
        %v394 = vmul.f32 %v392, %v316
        %395 = vst [vmem:[#allocation1] ss:$2 sm:$0xff] %v299
        %v396 = vld.sshfl [vmem:[#allocation1] sm:$0xff pattern:$0x75316420]
        %v397 = vld.sshfl [vmem:[#allocation1 + $0x8] sm:$0xff pattern:$0x75316420]
        %398 = vrot.lane.b32.xlu0 %v396, 112
        %v399 = vpop.permute.xlu0 %398
        %400 = vrot.lane.b32.xlu0 %v397, 112
        %v401 = vpop.permute.xlu0 %400
        %vm402 = vcmask 916480
        %v403 = vsel %vm402, %v399, %v401
        %v405 = vsel %vm402, %v401, 0.0
        %406 = vst [vmem:[#allocation1] ss:$2 sm:$0xff] %v299
        %v407 = vld.sshfl [vmem:[#allocation1] sm:$0xff pattern:$0x75316420]
        %v408 = vld.sshfl [vmem:[#allocation1 + $0x8] sm:$0xff pattern:$0x75316420]
        %409 = vrot.lane.b32.xlu0 %v407, 111
        %v410 = vpop.permute.xlu0 %409
        %411 = vrot.lane.b32.xlu0 %v408, 111
        %v412 = vpop.permute.xlu0 %411
        %vm413 = vcmask 908288
        %v414 = vsel %vm413, %v410, %v412
        %v417 = vsel %vm413, %v412, 0.0
        %v418 = vmul.f32 %v414, %v347
        %v419 = vmul.f32 %v417, %v348
        %v421 = vrot.slane %v331, 4
        %v422 = vrot.slane %v329, 4
        %v427 = vrot.slane %v365, 4
        %v428 = vrot.slane %v366, 4
        %431 = vst [vmem:[#allocation1] ss:$2 sm:$0xff] %v299
        %v432 = vld.sshfl [vmem:[#allocation1] sm:$0xff pattern:$0x75316420]
        %v433 = vld.sshfl [vmem:[#allocation1 + $0x8] sm:$0xff pattern:$0x75316420]
        %v438 = vrot.slane %v379, 4
        %v439 = vrot.slane %v380, 4
        %v443 = vrot.slane %v403, 4
        %v444 = vrot.slane %v405, 4
        %vm447 = vcmask 1043456
        %v448 = vsel %vm447, %v319, %v421
        %v449 = vsel %vm447, %v320, %v422
        %v450 = vsel %vm447, %v351, %v427
        %v451 = vsel %vm447, %v352, %v428
        %v452 = vsel %vm447, %v432, %v438
        %v453 = vsel %vm447, %v433, %v439
        %v454 = vsel %vm447, %v393, %v443
        %v455 = vsel %vm447, %v394, %v444
        %v456 = vld [vmem:[#allocation5] sm:$0xf]
        %v457 = vld [vmem:[%s2] sm:$0xf]
        %459 = vset.pattern.permute.xlu0 0
        %460 = vperm.xlu0 %459, %v457
        %v461 = vpop.permute.xlu0 %460
        %vm463 = vcmask 293888
        %v465 = vsel %vm463, %v456, 0
        %v468 = vsel %vm447, %v418, 0
        %v471 = vsel %vm447, %v419, 0
        %473 = vmatpush.msra.mxu0 0.0
        %474 = vmatpush.msra.mxu0 0.0
        %475 = vmatpush.msra.mxu0 0.0
        %476 = vmatpush.msra.mxu0 0.0
        %477 = vmatpush.msra.mxu0 0.0
        %478 = vmatpush.msra.mxu0 0.0
        %479 = vmatpush.msra.mxu0 0.0
        %480 = vmatpush.msra.mxu0 0.0
        %481 = vmatpush.msra.mxu0 0.0
        %482 = vmatpush.msra.mxu0 0.0
        %483 = vmatpush.msra.mxu0 0.0
        %484 = vmatpush.msra.mxu0 %v468
        %485 = vmatpush.msra.mxu0 %v454
        %486 = vmatpush.msra.mxu0 %v452
        %487 = vmatpush.msra.mxu0 %v450
        %488 = vmatpush.msra.mxu0 %v448
        %489 = vmatmul.f32.gmra.mxu0 %v465
        %v490 = vpop.f32.mrf.mxu0
        %v491 = vadd.f32 %v461, %v490
        %492 = vdwg.mxu0
        %493 = vmatpush.msra.mxu0 0.0
        %494 = vmatpush.msra.mxu0 0.0
        %495 = vmatpush.msra.mxu0 0.0
        %496 = vmatpush.msra.mxu0 0.0
        %497 = vmatpush.msra.mxu0 0.0
        %498 = vmatpush.msra.mxu0 0.0
        %499 = vmatpush.msra.mxu0 0.0
        %500 = vmatpush.msra.mxu0 0.0
        %501 = vmatpush.msra.mxu0 0.0
        %502 = vmatpush.msra.mxu0 0.0
        %503 = vmatpush.msra.mxu0 0.0
        %504 = vmatpush.msra.mxu0 %v471
        %505 = vmatpush.msra.mxu0 %v455
        %506 = vmatpush.msra.mxu0 %v453
        %507 = vmatpush.msra.mxu0 %v451
        %508 = vmatpush.msra.mxu0 %v449
        %509 = vmatmul.f32.gmra.mxu0 %v465
        %v510 = vpop.f32.mrf.mxu0
        %v511 = vadd.f32 %v461, %v510
        %512 = vdwg.mxu0
        %v513 = vmax.f32 %v491, 0.0
        %v514 = vmax.f32 %v511, 0.0
        %517 = vrot.lane.b32.xlu0 %v513, 17
        %v518 = vpop.permute.xlu0 %517
        %519 = vrot.lane.b32.xlu0 %v514, 17
        %v520 = vpop.permute.xlu0 %519
        %v521 = vsel %vm308, %v518, %v520
        %v524 = vsel %vm308, 0.0, %v518
        %v525 = vmul.f32 %v524, %v315
        %v526 = vmul.f32 %v521, %v316
        %527 = vrot.lane.b32.xlu0 %v513, 16
        %v528 = vpop.permute.xlu0 %527
        %529 = vrot.lane.b32.xlu0 %v514, 16
        %v530 = vpop.permute.xlu0 %529
        %v531 = vsel %vm328, %v528, %v530
        %v533 = vsel %vm328, 0.0, %v528
        %534 = vrot.lane.b32.xlu0 %v513, 15
        %v535 = vpop.permute.xlu0 %534
        %536 = vrot.lane.b32.xlu0 %v514, 15
        %v537 = vpop.permute.xlu0 %536
        %v538 = vsel %vm339, %v535, %v537
        %v541 = vsel %vm339, 0.0, %v535
        %v542 = vmul.f32 %v541, %v347
        %v543 = vmul.f32 %v538, %v348
        %544 = vrot.lane.b32.xlu0 %v513, 1
        %v545 = vpop.permute.xlu0 %544
        %546 = vrot.lane.b32.xlu0 %v514, 1
        %v547 = vpop.permute.xlu0 %546
        %v548 = vsel %vm360, %v545, %v547
        %v551 = vsel %vm360, 0.0, %v545
        %v552 = vmul.f32 %v551, %v315
        %v553 = vmul.f32 %v548, %v316
        %554 = vrot.lane.b32.xlu0 %v513, 127
        %v555 = vpop.permute.xlu0 %554
        %556 = vrot.lane.b32.xlu0 %v514, 127
        %v557 = vpop.permute.xlu0 %556
        %v558 = vsel %vm374, %v555, %v557
        %v561 = vsel %vm374, %v557, 0.0
        %v562 = vmul.f32 %v558, %v347
        %v563 = vmul.f32 %v561, %v348
        %564 = vrot.lane.b32.xlu0 %v513, 113
        %v565 = vpop.permute.xlu0 %564
        %566 = vrot.lane.b32.xlu0 %v514, 113
        %v567 = vpop.permute.xlu0 %566
        %v568 = vsel %vm388, %v565, %v567
        %v571 = vsel %vm388, %v567, 0.0
        %v572 = vmul.f32 %v568, %v315
        %v573 = vmul.f32 %v571, %v316
        %574 = vrot.lane.b32.xlu0 %v513, 112
        %v575 = vpop.permute.xlu0 %574
        %576 = vrot.lane.b32.xlu0 %v514, 112
        %v577 = vpop.permute.xlu0 %576
        %v578 = vsel %vm402, %v575, %v577
        %v580 = vsel %vm402, %v577, 0.0
        %581 = vrot.lane.b32.xlu0 %v513, 111
        %v582 = vpop.permute.xlu0 %581
        %583 = vrot.lane.b32.xlu0 %v514, 111
        %v584 = vpop.permute.xlu0 %583
        %v585 = vsel %vm413, %v582, %v584
        %v588 = vsel %vm413, %v584, 0.0
        %v589 = vmul.f32 %v585, %v347
        %v590 = vmul.f32 %v588, %v348
        %v592 = vrot.slane %v533, 4
        %v593 = vrot.slane %v531, 4
        %v598 = vrot.slane %v552, 4
        %v599 = vrot.slane %v553, 4
        %v604 = vrot.slane %v562, 4
        %v605 = vrot.slane %v563, 4
        %v609 = vrot.slane %v578, 4
        %v610 = vrot.slane %v580, 4
        %v613 = vsel %vm447, %v525, %v592
        %v614 = vsel %vm447, %v526, %v593
        %v615 = vsel %vm447, %v542, %v598
        %v616 = vsel %vm447, %v543, %v599
        %v617 = vsel %vm447, %v513, %v604
        %v618 = vsel %vm447, %v514, %v605
        %v619 = vsel %vm447, %v572, %v609
        %v620 = vsel %vm447, %v573, %v610
        %v621 = vld [vmem:[#allocation7] sm:$0xf]
        %v622 = vld [vmem:[%s4] sm:$0xf]
        %624 = vset.pattern.permute.xlu0 0
        %625 = vperm.xlu0 %624, %v622
        %v626 = vpop.permute.xlu0 %625
        %v629 = vsel %vm463, %v621, 0
        %v632 = vsel %vm447, %v589, 0
        %v635 = vsel %vm447, %v590, 0
        %637 = vmatpush.msra.mxu0 0.0
        %638 = vmatpush.msra.mxu0 0.0
        %639 = vmatpush.msra.mxu0 0.0
        %640 = vmatpush.msra.mxu0 0.0
        %641 = vmatpush.msra.mxu0 0.0
        %642 = vmatpush.msra.mxu0 0.0
        %643 = vmatpush.msra.mxu0 0.0
        %644 = vmatpush.msra.mxu0 0.0
        %645 = vmatpush.msra.mxu0 0.0
        %646 = vmatpush.msra.mxu0 0.0
        %647 = vmatpush.msra.mxu0 0.0
        %648 = vmatpush.msra.mxu0 %v632
        %649 = vmatpush.msra.mxu0 %v619
        %650 = vmatpush.msra.mxu0 %v617
        %651 = vmatpush.msra.mxu0 %v615
        %652 = vmatpush.msra.mxu0 %v613
        %653 = vmatmul.f32.gmra.mxu0 %v629
        %v654 = vpop.f32.mrf.mxu0
        %v655 = vadd.f32 %v626, %v654
        %656 = vdwg.mxu0
        %657 = vmatpush.msra.mxu0 0.0
        %658 = vmatpush.msra.mxu0 0.0
        %659 = vmatpush.msra.mxu0 0.0
        %660 = vmatpush.msra.mxu0 0.0
        %661 = vmatpush.msra.mxu0 0.0
        %662 = vmatpush.msra.mxu0 0.0
        %663 = vmatpush.msra.mxu0 0.0
        %664 = vmatpush.msra.mxu0 0.0
        %665 = vmatpush.msra.mxu0 0.0
        %666 = vmatpush.msra.mxu0 0.0
        %667 = vmatpush.msra.mxu0 0.0
        %668 = vmatpush.msra.mxu0 %v635
        %669 = vmatpush.msra.mxu0 %v620
        %670 = vmatpush.msra.mxu0 %v618
        %671 = vmatpush.msra.mxu0 %v616
        %672 = vmatpush.msra.mxu0 %v614
        %673 = vmatmul.f32.gmra.mxu0 %v629
        %v674 = vpop.f32.mrf.mxu0
        %v675 = vadd.f32 %v626, %v674
        %676 = vdwg.mxu0
        %677 = vst [vmem:[#allocation1] ss:$2 sm:$0xff] %v299
        %v678 = vld.sshfl [vmem:[#allocation1] sm:$0xff pattern:$0x75316420]
        %v679 = vld.sshfl [vmem:[#allocation1 + $0x8] sm:$0xff pattern:$0x75316420]
        %v682 = vadd.f32 %v655, %v678
        %v683 = vadd.f32 %v675, %v679
        %v684 = vmax.f32 %v682, 0.0
        %v685 = vmax.f32 %v683, 0.0
        %v688 = vrot.slane %v685, 4
        %v689 = vsel %vm447, %v684, %v688
        %691 = vst [vmem:[%s298] sm:$0xff] %v689
        %s692 = sand.u32 %s163, 1
        %s693 = scalar_lea.sflag [#allocation4], %s692
        %s694 = sand.u32 %s163, 1
        %s695 = smul.addr %s694, 8
        %s696 = scalar_lea.vmem [#allocation8], %s695
        // Predicated region
        $region57: #{tpu_custom_call.1} parent=43 // pred_check
          %p697 = pneg %p173
        $region58: #{tpu_custom_call.1} parent=43 // pred_check_branch
          %699 = sbr.rel (%p697) target = $region60
        $region59: #{tpu_custom_call.1} parent=43 // pred_region
          %701 = vsyncadd %s693, 0
          %s702 = smul.addr %s24, 2
          %s703 = smul.addr %s702, 4
          %s704 = scalar_lea.hbm %s6, %s703
          %s706 = sshll.u32 %s696, 4
          %s707 = int_to_ptr.vmem [resolvable:$true] %s706
          %s708 = sshll.u32 %s704, 4
          %s709 = int_to_ptr.hbm [resolvable:$true] %s708
          %711 = dma.vmem_to_hbm [thread:$0]  %s707, 128, %s709, %s693
        $region60: #{tpu_custom_call.1} parent=43 // pred_fallthru
          _
      $region44: #{tpu_custom_call.1} parent=5 // pred_fallthru
        _
      %p712 = scmp.le.s32.totalorder 2, %s19
      // Predicated region
      $region61: #{tpu_custom_call.1} parent=5 // pred_check
        %p713 = pneg %p712
      $region62: #{tpu_custom_call.1} parent=5 // pred_check_branch
        %715 = sbr.rel (%p713) target = $region64
      $region63: #{tpu_custom_call.1} parent=5 // pred_region
        %s716 = ssub.s32 %s19, 2
        // Predicated region
        $region65: #{tpu_custom_call.1} parent=63 // pred_check
          %p717 = pneg %p179
        $region66: #{tpu_custom_call.1} parent=63 // pred_check_branch
          %719 = sbr.rel (%p717) target = $region68
        $region67: #{tpu_custom_call.1} parent=63 // pred_region
          %s720 = sand.u32 %s164, 1
          %s721 = scalar_lea.sflag [#allocation4], %s720
          %s722 = sand.u32 %s164, 1
          %s723 = smul.addr %s722, 8
          %s724 = scalar_lea.vmem [#allocation8], %s723
          %726 = dma.done %s721, 128
        $region68: #{tpu_custom_call.1} parent=63 // pred_fallthru
          _
      $region64: #{tpu_custom_call.1} parent=5 // pred_fallthru
        _
    $region6: #{tpu_custom_call.1} parent=1 // loop_footer
      %s23 = sadd.s32 1, %s19
    $region7: #{tpu_custom_call.1} parent=1 // loop_footer_branch
      %18 = sbr.rel target = $region3
    $region8: #{tpu_custom_call.1} parent=1 // loop_exit
      _
    %727 = vsyncpa [#allocation3], 1
    %s728 = scalar_lea.sflag [#allocation3], 1
    %729 = vsyncpa %s728, 1
    %730 = vsyncpa [#allocation6], 1
    %731 = vsyncpa [#allocation4], 1
    %s732 = scalar_lea.sflag [#allocation4], 1
    %733 = vsyncpa %s732, 1

</llo_original>
